<compile_context>
chip_gen: v7x
topology: tpu7x:2x2x1
jax: 0.10.0
libtpu: 0.0.40
codegen_flags: <defaults>
</compile_context>

<pallas_src>
import functools

import jax
import jax.numpy as jnp
from jax.experimental import pallas as pl
from jax.experimental.pallas import tpu as pltpu

EPS = 1e-5


def _layernorm_kernel(x_ref, gamma_ref, beta_ref, o_ref, *, d_true):
    # x_ref: (tile_rows, Dp) block in VMEM; gamma/beta: (1, Dp), zero-padded
    # beyond the true feature dim, so padded lanes contribute 0 to the sums
    # and produce 0 in the output (sliced away by the wrapper).
    x = x_ref[...].astype(jnp.float32)

    # Fused reduction pass: sums of x and x*x from the same loaded tile.
    s1 = jnp.sum(x, axis=-1, keepdims=True)
    s2 = jnp.sum(x * x, axis=-1, keepdims=True)
    inv_d = jnp.float32(1.0 / d_true)
    mean = s1 * inv_d
    var = jnp.maximum(s2 * inv_d - mean * mean, 0.0)   # biased variance (PyTorch)
    inv = jax.lax.rsqrt(var + EPS)

    g = gamma_ref[...].astype(jnp.float32)
    b = beta_ref[...].astype(jnp.float32)
    o_ref[...] = ((x - mean) * inv * g + b).astype(o_ref.dtype)


def _choose_tile_rows(R, Dp, itemsize):
    """Largest row tile (multiple of the sublane granularity) within a VMEM budget."""
    sub = {4: 8, 2: 16, 1: 32}.get(itemsize, 8)
    if R <= sub:
        return R  # full-extent block for tiny inputs (legal even if R % 8 != 0)

    # Conservative pipelined working-set budget that fits every chip
    # (v5e 16 MiB default scoped ... v7x 64 MiB physical).
    budget = 8 * 1024 * 1024
    # (in + out) tiles, double-buffered, plus ~3 fp32 temporaries per row.
    bytes_per_row = 2 * 2 * Dp * itemsize + 3 * Dp * 4
    cap = max(sub, min(2048, (budget // bytes_per_row) // sub * sub))

    rows_padded = pl.cdiv(R, sub) * sub
    tile = min(cap, rows_padded)
    # Keep at least 2 grid steps when possible so v7x can shard the row axis
    # across its 2 TensorCores (no-op on v5e/v6e).
    if tile >= rows_padded and rows_padded >= 2 * sub:
        tile = pl.cdiv(rows_padded // 2, sub) * sub
    return tile


def layer_norm(x, gamma, beta):
    """LayerNorm over the last dim of x, matching F.layer_norm(x, (D,), gamma, beta)."""
    orig_shape = x.shape
    D = orig_shape[-1]
    x2 = x.reshape(-1, D)
    R = x2.shape[0]

    # Lane-dense feature dim: pad D up to a multiple of 128 (zero padding),
    # so every load/store is an unmasked full-lane access.
    Dp = pl.cdiv(D, 128) * 128
    if Dp != D:
        x2 = jnp.pad(x2, ((0, 0), (0, Dp - D)))
        gamma_p = jnp.pad(gamma, (0, Dp - D))
        beta_p = jnp.pad(beta, (0, Dp - D))
    else:
        gamma_p, beta_p = gamma, beta
    gamma2 = gamma_p.reshape(1, Dp)
    beta2 = beta_p.reshape(1, Dp)

    itemsize = jnp.dtype(x.dtype).itemsize
    tile_rows = _choose_tile_rows(R, Dp, itemsize)
    grid = (pl.cdiv(R, tile_rows),)   # ragged last block is masked by Pallas

    kernel = functools.partial(_layernorm_kernel, d_true=float(D))

    out = pl.pallas_call(
        kernel,
        out_shape=jax.ShapeDtypeStruct((R, Dp), x.dtype),
        grid_spec=pltpu.PrefetchScalarGridSpec(
            num_scalar_prefetch=0,
            grid=grid,
            in_specs=[
                pl.BlockSpec((tile_rows, Dp), lambda i: (i, 0)),
                pl.BlockSpec((1, Dp), lambda i: (0, 0)),
                pl.BlockSpec((1, Dp), lambda i: (0, 0)),
            ],
            out_specs=pl.BlockSpec((tile_rows, Dp), lambda i: (i, 0)),
        ),
        compiler_params=pltpu.CompilerParams(
            dimension_semantics=("parallel",),
            vmem_limit_bytes=32 * 1024 * 1024,
        ),
    )(x2, gamma2, beta2)

    if Dp != D:
        out = out[:, :D]
    return out.reshape(orig_shape)


if __name__ == "__main__":
    key = jax.random.PRNGKey(0)
    B, S, D = 2, 8, 32  # batch=2, seq=8, hidden=32

    x = jax.random.normal(key, (B, S, D), dtype=jnp.float32)

    # Deterministic parameter init, matching the module's __init__:
    gamma = jnp.ones((D,), dtype=jnp.float32)   # nn.Parameter(torch.ones(dim))
    beta = jnp.zeros((D,), dtype=jnp.float32)   # buffer torch.zeros(dim)

    y = layer_norm(x, gamma, beta)
    y = jax.block_until_ready(y)

    # sanity check against pure-JAX reference
    mean = jnp.mean(x, axis=-1, keepdims=True)
    var = jnp.mean((x - mean) ** 2, axis=-1, keepdims=True)
    ref = (x - mean) * jax.lax.rsqrt(var + EPS) * gamma + beta
    assert jnp.allclose(y, ref, atol=1e-4, rtol=1e-4), float(jnp.max(jnp.abs(y - ref)))

    print("KERNEL_OK")
</pallas_src>

<mosaic_0001>
module attributes {stable_mosaic.version = 11 : i64} {
  func.func @_layernorm_kernel(%arg0: i32, %arg1: memref<8x128xf32, #tpu.memory_space<vmem>>, %arg2: memref<1x128xf32, #tpu.memory_space<vmem>>, %arg3: memref<1x128xf32, #tpu.memory_space<vmem>>, %arg4: memref<8x128xf32, #tpu.memory_space<vmem>>) attributes {dimension_semantics = [#tpu.dimension_semantics<parallel>], iteration_bounds = array<i64: 2>, scalar_prefetch = 0 : i64, scratch_operands = 0 : i64, tpu.core_type = #tpu.core_type<tc>, window_params = [{transform_indices = @transform_0, window_bounds = array<i64: 8, 128>}, {pipeline_mode = #tpu.pipeline_mode<synchronous>, transform_indices = @transform_1, window_bounds = array<i64: 1, 128>}, {pipeline_mode = #tpu.pipeline_mode<synchronous>, transform_indices = @transform_2, window_bounds = array<i64: 1, 128>}, {transform_indices = @transform_3, window_bounds = array<i64: 8, 128>}]} {
    %c0 = arith.constant 0 : index
    %c0_0 = arith.constant 0 : index
    %0 = vector.load %arg1[%c0, %c0_0] : memref<8x128xf32, #tpu.memory_space<vmem>>, vector<8x128xf32>
    %cst = arith.constant dense<0.000000e+00> : vector<8xf32>
    %1 = vector.multi_reduction <add>, %0, %cst [1] : vector<8x128xf32> to vector<8xf32>
    %2 = vector.shape_cast %1 : vector<8xf32> to vector<8x1xf32>
    %3 = arith.mulf %0, %0 : vector<8x128xf32>
    %cst_1 = arith.constant dense<0.000000e+00> : vector<8xf32>
    %4 = vector.multi_reduction <add>, %3, %cst_1 [1] : vector<8x128xf32> to vector<8xf32>
    %5 = vector.shape_cast %4 : vector<8xf32> to vector<8x1xf32>
    %cst_2 = arith.constant 3.125000e-02 : f32
    %6 = vector.broadcast %cst_2 : f32 to vector<8x1xf32>
    %7 = arith.mulf %2, %6 : vector<8x1xf32>
    %cst_3 = arith.constant 3.125000e-02 : f32
    %8 = vector.broadcast %cst_3 : f32 to vector<8x1xf32>
    %9 = arith.mulf %5, %8 : vector<8x1xf32>
    %10 = arith.mulf %7, %7 : vector<8x1xf32>
    %11 = arith.subf %9, %10 : vector<8x1xf32>
    %cst_4 = arith.constant 0.000000e+00 : f32
    %12 = vector.broadcast %cst_4 : f32 to vector<8x1xf32>
    %13 = arith.maximumf %11, %12 : vector<8x1xf32>
    %cst_5 = arith.constant 9.99999974E-6 : f32
    %14 = vector.broadcast %cst_5 : f32 to vector<8x1xf32>
    %15 = arith.addf %13, %14 : vector<8x1xf32>
    %16 = math.rsqrt %15 : vector<8x1xf32>
    %c0_6 = arith.constant 0 : index
    %c0_7 = arith.constant 0 : index
    %17 = vector.load %arg2[%c0_6, %c0_7] : memref<1x128xf32, #tpu.memory_space<vmem>>, vector<1x128xf32>
    %c0_8 = arith.constant 0 : index
    %c0_9 = arith.constant 0 : index
    %18 = vector.load %arg3[%c0_8, %c0_9] : memref<1x128xf32, #tpu.memory_space<vmem>>, vector<1x128xf32>
    %19 = vector.broadcast %7 : vector<8x1xf32> to vector<8x128xf32>
    %20 = arith.subf %0, %19 : vector<8x128xf32>
    %21 = vector.broadcast %16 : vector<8x1xf32> to vector<8x128xf32>
    %22 = arith.mulf %20, %21 : vector<8x128xf32>
    %23 = vector.broadcast %17 : vector<1x128xf32> to vector<8x128xf32>
    %24 = arith.mulf %22, %23 : vector<8x128xf32>
    %25 = vector.broadcast %18 : vector<1x128xf32> to vector<8x128xf32>
    %26 = arith.addf %24, %25 : vector<8x128xf32>
    %c0_10 = arith.constant 0 : index
    %c0_11 = arith.constant 0 : index
    %27 = vector.load %arg4[%c0_10, %c0_11] : memref<8x128xf32, #tpu.memory_space<vmem>>, vector<8x128xf32>
    tpu.vector_store %arg4[%c0_10, %c0_11], %26 {strides = array<i32>} : memref<8x128xf32, #tpu.memory_space<vmem>>, vector<8x128xf32>,
    return
  }
  func.func @transform_0(%arg0: i32) -> (i32, i32) {
    %c0_i32 = arith.constant 0 : i32
    %c0_i32_0 = arith.constant 0 : i32
    return %arg0, %c0_i32 : i32, i32
  }
  func.func @transform_1(%arg0: i32) -> (i32, i32) {
    %c0_i32 = arith.constant 0 : i32
    %c0_i32_0 = arith.constant 0 : i32
    %c0_i32_1 = arith.constant 0 : i32
    return %c0_i32, %c0_i32_0 : i32, i32
  }
  func.func @transform_2(%arg0: i32) -> (i32, i32) {
    %c0_i32 = arith.constant 0 : i32
    %c0_i32_0 = arith.constant 0 : i32
    %c0_i32_1 = arith.constant 0 : i32
    return %c0_i32, %c0_i32_0 : i32, i32
  }
  func.func @transform_3(%arg0: i32) -> (i32, i32) {
    %c0_i32 = arith.constant 0 : i32
    %c0_i32_0 = arith.constant 0 : i32
    return %arg0, %c0_i32 : i32, i32
  }
}

</mosaic_0001>

<llo_original>
// kernel: tpu_custom_call.1
$region0: #{tpu_custom_call.1}
  #allocation0 [shape = 'u32[]', space=smem, size = 0x4, offset = 0x4, fixed_abs, tag = 'smem constant byte address 0x4 - core index']
  #allocation1 [shape = 'u32[144,128]{1,0:T(1,128)}', space=vmem, size = 0x12000, scoped, tag = 'internal scratch']
  %s0 = inlined_call_operand.hbm [shape: f32[16,128], index: 0, kind: input, shape index: {}]
  %s1 = inlined_call_operand.vmem [shape: f32[1,128], index: 1, kind: input, shape index: {}]
  %s2 = inlined_call_operand.vmem [shape: f32[1,128], index: 2, kind: input, shape index: {}]
  %s3 = inlined_call_operand.hbm [shape: f32[16,128], index: 3, kind: output, shape index: {}]
  %s4 = sld [smem:[#allocation0]]
  $region49: #{tpu_custom_call.1} parent=0
    _
  %s6 = ssub.s32 1, %s4
  %s7 = scalar_select 0, %s6, %s4
  $region1: #{tpu_custom_call.1} parent=0
    #allocation2 [shape = 'u8[8192]{0}', space=vmem, size = 0x2000, scoped, tag = 'input window, operand 0']
    #allocation3 [shape = 's32[2]{0}', space=sflag, size = 0x8, scoped, tag = 'scoped memory for tpu_custom_call.1']
    #allocation4 [shape = 's32[2]{0}', space=sflag, size = 0x8, scoped, tag = 'scoped memory for tpu_custom_call.1']
    #allocation5 [shape = 'u8[8192]{0}', space=vmem, size = 0x2000, scoped, tag = 'output window, operand 0']
    %8 = vsyncpa [#allocation3], 0
    %s9 = scalar_lea.sflag [#allocation3], 1
    %10 = vsyncpa %s9, 0
    %11 = vsyncpa [#allocation4], 0
    %s12 = scalar_lea.sflag [#allocation4], 1
    %13 = vsyncpa %s12, 0
    loop: start=0, step=1, limit=4
    $region2: #{tpu_custom_call.1} parent=1 // loop_pre_header
      _
    $region3: #{tpu_custom_call.1} parent=1 // loop_header
      %s15 = sphi 0, %s19
      %p16 = scmp.ge.s32.totalorder %s15, 4
      %s25 = sphi 0, %s27
      %s28 = sphi 0, %s25
      %s29 = sphi 0, %s28
      %s45 = sphi 0, %s29
      %s49 = sphi 0, %s49
      %s51 = sphi 0, %s49
      %s52 = sphi 0, %s51
      %s66 = sphi 0, %s52
      %s70 = sphi 0, %s70
      %s72 = sphi 0, %s70
      %s73 = sphi 0, %s72
      %s87 = sphi 0, %s73
      %s93 = sphi 0, %s95
      %s96 = sphi 0, %s93
      %s97 = sphi 0, %s96
      %s113 = sphi 0, %s97
    $region4: #{tpu_custom_call.1} parent=1 // loop_header_branch
      %18 = sbr.rel (%p16) target = $region8
    $region5: #{tpu_custom_call.1} parent=1 // loop_body
      %s20 = ssub.s32 %s15, 1
      %s21 = ssub.s32 %s15, 2
      %s22 = sadd.s32 %s15, 1
      %s23 = ssub.s32 %s15, %s22
      %p24 = scmp.eq.s32.totalorder %s23, 0
      %s26 = sadd.s32 %s25, 1
      %s27 = scalar_select %p24, %s25, %s26
      %p30 = pneg %p24
      %p31 = scmp.eq.s32.totalorder %s15, 1
      %p32 = por %p30, %p31
      %p33 = scmp.ne.s32.totalorder %s25, %s28
      %p34 = scmp.eq.s32.totalorder %s15, 0
      %p35 = por %p33, %p34
      %p36 = scmp.ne.s32.totalorder %s25, %s28
      %p37 = scmp.eq.s32.totalorder %s20, 1
      %p38 = por %p36, %p37
      %p39 = scmp.ne.s32.totalorder %s28, %s29
      %p40 = scmp.eq.s32.totalorder %s20, 0
      %p41 = por %p39, %p40
      %p42 = scmp.ne.s32.totalorder %s28, %s29
      %p43 = scmp.eq.s32.totalorder %s21, 1
      %p44 = por %p42, %p43
      %p46 = scmp.ne.s32.totalorder %s29, %s45
      %p47 = scmp.eq.s32.totalorder %s21, 0
      %p48 = por %p46, %p47
      %s50 = sadd.s32 %s49, 1
      %p53 = scmp.eq.s32.totalorder %s15, 1
      %p54 = scmp.ne.s32.totalorder %s49, %s51
      %p55 = scmp.eq.s32.totalorder %s15, 0
      %p56 = por %p54, %p55
      %p57 = scmp.ne.s32.totalorder %s49, %s51
      %p58 = scmp.eq.s32.totalorder %s20, 1
      %p59 = por %p57, %p58
      %p60 = scmp.ne.s32.totalorder %s51, %s52
      %p61 = scmp.eq.s32.totalorder %s20, 0
      %p62 = por %p60, %p61
      %p63 = scmp.ne.s32.totalorder %s51, %s52
      %p64 = scmp.eq.s32.totalorder %s21, 1
      %p65 = por %p63, %p64
      %p67 = scmp.ne.s32.totalorder %s52, %s66
      %p68 = scmp.eq.s32.totalorder %s21, 0
      %p69 = por %p67, %p68
      %s71 = sadd.s32 %s70, 1
      %p74 = scmp.eq.s32.totalorder %s15, 1
      %p75 = scmp.ne.s32.totalorder %s70, %s72
      %p76 = scmp.eq.s32.totalorder %s15, 0
      %p77 = por %p75, %p76
      %p78 = scmp.ne.s32.totalorder %s70, %s72
      %p79 = scmp.eq.s32.totalorder %s20, 1
      %p80 = por %p78, %p79
      %p81 = scmp.ne.s32.totalorder %s72, %s73
      %p82 = scmp.eq.s32.totalorder %s20, 0
      %p83 = por %p81, %p82
      %p84 = scmp.ne.s32.totalorder %s72, %s73
      %p85 = scmp.eq.s32.totalorder %s21, 1
      %p86 = por %p84, %p85
      %p88 = scmp.ne.s32.totalorder %s73, %s87
      %p89 = scmp.eq.s32.totalorder %s21, 0
      %p90 = por %p88, %p89
      %s91 = ssub.s32 %s15, %s22
      %p92 = scmp.eq.s32.totalorder %s91, 0
      %s94 = sadd.s32 %s93, 1
      %s95 = scalar_select %p92, %s93, %s94
      %p98 = pneg %p92
      %p99 = scmp.eq.s32.totalorder %s15, 1
      %p100 = por %p98, %p99
      %p101 = scmp.ne.s32.totalorder %s93, %s96
      %p102 = scmp.eq.s32.totalorder %s15, 0
      %p103 = por %p101, %p102
      %p104 = scmp.ne.s32.totalorder %s93, %s96
      %p105 = scmp.eq.s32.totalorder %s20, 1
      %p106 = por %p104, %p105
      %p107 = scmp.ne.s32.totalorder %s96, %s97
      %p108 = scmp.eq.s32.totalorder %s20, 0
      %p109 = por %p107, %p108
      %p110 = scmp.ne.s32.totalorder %s96, %s97
      %p111 = scmp.eq.s32.totalorder %s21, 1
      %p112 = por %p110, %p111
      %p114 = scmp.ne.s32.totalorder %s97, %s113
      %p115 = scmp.eq.s32.totalorder %s21, 0
      %p116 = por %p114, %p115
      %p117 = scmp.le.s32.totalorder 1, %s15
      %p118 = scmp.lt.s32.totalorder %s15, 3
      %p119 = pnand %p117, %p118
      %p120 = pneg %p119
      // Predicated region
      $region9: #{tpu_custom_call.1} parent=5 // pred_check
        _
      $region10: #{tpu_custom_call.1} parent=5 // pred_check_branch
        %122 = sbr.rel (%p119) target = $region12
      $region11: #{tpu_custom_call.1} parent=5 // pred_region
        %s123 = ssub.s32 %s15, 1
        // Predicated region
        $region13: #{tpu_custom_call.1} parent=11 // pred_check
          %p124 = pneg %p62
        $region14: #{tpu_custom_call.1} parent=11 // pred_check_branch
          %126 = sbr.rel (%p124) target = $region16
        $region15: #{tpu_custom_call.1} parent=11 // pred_region
          _
        $region16: #{tpu_custom_call.1} parent=11 // pred_fallthru
          _
        // Predicated region
        $region17: #{tpu_custom_call.1} parent=11 // pred_check
          %p127 = pneg %p83
        $region18: #{tpu_custom_call.1} parent=11 // pred_check_branch
          %129 = sbr.rel (%p127) target = $region20
        $region19: #{tpu_custom_call.1} parent=11 // pred_region
          _
        $region20: #{tpu_custom_call.1} parent=11 // pred_fallthru
          _
      $region12: #{tpu_custom_call.1} parent=5 // pred_fallthru
        _
      %p130 = scmp.lt.s32.totalorder %s15, 2
      // Predicated region
      $region21: #{tpu_custom_call.1} parent=5 // pred_check
        %p131 = pneg %p130
      $region22: #{tpu_custom_call.1} parent=5 // pred_check_branch
        %133 = sbr.rel (%p131) target = $region24
      $region23: #{tpu_custom_call.1} parent=5 // pred_region
        // Predicated region
        $region25: #{tpu_custom_call.1} parent=23 // pred_check
          %p134 = pneg %p35
        $region26: #{tpu_custom_call.1} parent=23 // pred_check_branch
          %136 = sbr.rel (%p134) target = $region28
        $region27: #{tpu_custom_call.1} parent=23 // pred_region
          %s137 = sand.u32 %s25, 1
          %s138 = scalar_lea.sflag [#allocation3], %s137
          %s139 = sand.u32 %s25, 1
          %s140 = smul.addr %s139, 8
          %s141 = scalar_lea.vmem [#allocation2], %s140
          %s143 = ssub.s32 128, 128
          %144 = vsyncadd %s138, %s143
          %s145 = smul.addr %s15, 128
          %s146 = scalar_lea.hbm %s0, %s145
          %s148 = sshll.u32 %s141, 4
          %s149 = int_to_ptr.vmem [resolvable:$true] %s148
          %151 = dma.hbm_to_vmem [thread:$0]  %s146, 128, %s149, %s138
        $region28: #{tpu_custom_call.1} parent=23 // pred_fallthru
          _
      $region24: #{tpu_custom_call.1} parent=5 // pred_fallthru
        _
      %p152 = scmp.le.s32.totalorder 1, %s15
      %p153 = scmp.lt.s32.totalorder %s15, 3
      %p154 = pnand %p152, %p153
      %p155 = pneg %p154
      // Predicated region
      $region29: #{tpu_custom_call.1} parent=5 // pred_check
        _
      $region30: #{tpu_custom_call.1} parent=5 // pred_check_branch
        %157 = sbr.rel (%p154) target = $region32
      $region31: #{tpu_custom_call.1} parent=5 // pred_region
        %s158 = ssub.s32 %s15, 1
        %s159 = sand.u32 %s28, 1
        %s160 = scalar_lea.sflag [#allocation3], %s159
        %s161 = sand.u32 %s28, 1
        %s162 = smul.addr %s161, 8
        %s163 = scalar_lea.vmem [#allocation2], %s162
        // Predicated region
        $region33: #{tpu_custom_call.1} parent=31 // pred_check
          %p164 = pneg %p41
        $region34: #{tpu_custom_call.1} parent=31 // pred_check_branch
          %166 = sbr.rel (%p164) target = $region36
        $region35: #{tpu_custom_call.1} parent=31 // pred_region
          %167 = dma.done %s160, 128
        $region36: #{tpu_custom_call.1} parent=31 // pred_fallthru
          _
        %s168 = sand.u32 %s28, 1
        %s169 = scalar_lea.sflag [#allocation3], %s168
        %s170 = sand.u32 %s28, 1
        %s171 = smul.addr %s170, 8
        %s172 = scalar_lea.vmem [#allocation2], %s171
        %p173 = pneg %p41
        %p174 = pneg %p38
        %p175 = pneg %p62
        %p176 = pneg %p59
        %p177 = pneg %p83
        %p178 = pneg %p80
        %p179 = pneg %p109
        %p180 = pneg %p106
        %s181 = sand.u32 %s96, 1
        %s182 = scalar_lea.sflag [#allocation4], %s181
        %s183 = sand.u32 %s96, 1
        %s184 = smul.addr %s183, 8
        %s185 = scalar_lea.vmem [#allocation5], %s184
        %v186 = vld [vmem:[%s163] sm:$0xff]
        %187 = vadd.xlane.f32.xlu0 %v186
        %v188 = vpop.xlane.xlu0 %187
        %v189 = vmul.f32 %v186, %v186
        %190 = vadd.xlane.f32.xlu0 %v189
        %v191 = vpop.xlane.xlu0 %190
        %v192 = vmul.f32 %v188, 0.03125
        %v193 = vmul.f32 %v191, 0.03125
        %v194 = vmul.f32 %v192, %v192
        %v195 = vsub.f32 %v193, %v194
        %v196 = vmax.f32 %v195, 0.0
        %v197 = vadd.f32 %v196, 1e-05
        %v198 = vrsqrt.pop %v197
        %v199 = vld [vmem:[%s1] sm:$0x1]
        %v200 = vld [vmem:[%s2] sm:$0x1]
        %v201 = vsub.f32 %v186, %v192
        %v202 = vmul.f32 %v201, %v198
        %v204 = vlaneseq
        %v205 = vshrl.u32 %v204, 7
        %v206 = vsub.s32 0, %v205
        %v207 = vrot.slane %v199, %v206
        %v209 = vmul.f32 %v202, %v207
        %v211 = vlaneseq
        %v212 = vshrl.u32 %v211, 7
        %v213 = vsub.s32 0, %v212
        %v214 = vrot.slane %v200, %v213
        %v216 = vadd.f32 %v209, %v214
        %217 = vst [vmem:[%s185] sm:$0xff] %v216
        %s218 = sand.u32 %s96, 1
        %s219 = scalar_lea.sflag [#allocation4], %s218
        %s220 = sand.u32 %s96, 1
        %s221 = smul.addr %s220, 8
        %s222 = scalar_lea.vmem [#allocation5], %s221
        // Predicated region
        $region37: #{tpu_custom_call.1} parent=31 // pred_check
          %p223 = pneg %p106
        $region38: #{tpu_custom_call.1} parent=31 // pred_check_branch
          %225 = sbr.rel (%p223) target = $region40
        $region39: #{tpu_custom_call.1} parent=31 // pred_region
          %s227 = ssub.s32 128, 128
          %228 = vsyncadd %s219, %s227
          %s229 = smul.addr %s20, 128
          %s230 = scalar_lea.hbm %s3, %s229
          %s232 = sshll.u32 %s222, 4
          %s233 = int_to_ptr.vmem [resolvable:$true] %s232
          %235 = dma.vmem_to_hbm [thread:$0]  %s233, 128, %s230, %s219
        $region40: #{tpu_custom_call.1} parent=31 // pred_fallthru
          _
      $region32: #{tpu_custom_call.1} parent=5 // pred_fallthru
        _
      %p236 = scmp.le.s32.totalorder 2, %s15
      // Predicated region
      $region41: #{tpu_custom_call.1} parent=5 // pred_check
        %p237 = pneg %p236
      $region42: #{tpu_custom_call.1} parent=5 // pred_check_branch
        %239 = sbr.rel (%p237) target = $region44
      $region43: #{tpu_custom_call.1} parent=5 // pred_region
        %s240 = ssub.s32 %s15, 2
        // Predicated region
        $region45: #{tpu_custom_call.1} parent=43 // pred_check
          %p241 = pneg %p112
        $region46: #{tpu_custom_call.1} parent=43 // pred_check_branch
          %243 = sbr.rel (%p241) target = $region48
        $region47: #{tpu_custom_call.1} parent=43 // pred_region
          %s244 = sand.u32 %s97, 1
          %s245 = scalar_lea.sflag [#allocation4], %s244
          %s246 = sand.u32 %s97, 1
          %s247 = smul.addr %s246, 8
          %s248 = scalar_lea.vmem [#allocation5], %s247
          %249 = dma.done %s245, 128
        $region48: #{tpu_custom_call.1} parent=43 // pred_fallthru
          _
      $region44: #{tpu_custom_call.1} parent=5 // pred_fallthru
        _
    $region6: #{tpu_custom_call.1} parent=1 // loop_footer
      %s19 = sadd.s32 1, %s15
    $region7: #{tpu_custom_call.1} parent=1 // loop_footer_branch
      %14 = sbr.rel target = $region3
    $region8: #{tpu_custom_call.1} parent=1 // loop_exit
      _
    %250 = vsyncpa [#allocation3], 1
    %s251 = scalar_lea.sflag [#allocation3], 1
    %252 = vsyncpa %s251, 1
    %253 = vsyncpa [#allocation4], 1
    %s254 = scalar_lea.sflag [#allocation4], 1
    %255 = vsyncpa %s254, 1

</llo_original>
